<compile_context>
chip_gen: v6e
topology: v6e:2x2x1
jax: 0.10.0
libtpu: 0.0.40
codegen_flags: <defaults>
</compile_context>

<pallas_src>
import functools

import jax
import jax.numpy as jnp
from jax.experimental import pallas as pl
from jax.experimental.pallas import tpu as pltpu

LANE = 128
SUBLANE = 16          # bf16 sublane packing -> batch tiles kept multiples of 16


def _round_up(x, m):
    return (x + m - 1) // m * m


def _pad2d(a, rows, cols):
    r, c = a.shape
    return jnp.pad(a, ((0, rows - r), (0, cols - c)))


# ---------------------------------------------------------------------------
# Kernel
# ---------------------------------------------------------------------------
def mlp_kernel(x_ref, w1_ref, b1_ref, w2_ref, b2_ref, w3_ref, b3_ref,
               out_ref, *, n_out_p):
    """Whole MLP on one batch tile. Matmul operands are bf16; accumulation
    and all bias/ReLU/tanh math stay f32."""
    x = x_ref[...]                                                    # bf16
    # fc1 + relu
    h1 = jnp.dot(x, w1_ref[...], preferred_element_type=jnp.float32)
    h1 = jnp.maximum(h1 + b1_ref[...], 0.0).astype(jnp.bfloat16)
    # fc2 + relu
    h2 = jnp.dot(h1, w2_ref[...], preferred_element_type=jnp.float32)
    h2 = jnp.maximum(h2 + b2_ref[...], 0.0).astype(jnp.bfloat16)
    # fused fc3_s | fc3_t (each head padded to its own 128-lane group)
    y = jnp.dot(h2, w3_ref[...], preferred_element_type=jnp.float32) + b3_ref[...]
    # tanh only on the s-head lane group; t-head lanes written untouched.
    # Both stores are 128-lane aligned -> lane-dense, unmasked vst.
    out_ref[:, :n_out_p] = jnp.tanh(y[:, :n_out_p]).astype(out_ref.dtype)
    out_ref[:, n_out_p:] = y[:, n_out_p:].astype(out_ref.dtype)
    # TODO(synk): optionally emit a bf16 output slab (out_shape dtype bf16) if
    # downstream consumers tolerate it — halves HBM writeback / vst traffic.


# ---------------------------------------------------------------------------
# Parameter preparation: fuse fc3_s|fc3_t, pad to 128-lane tiles, cast to bf16
# ---------------------------------------------------------------------------
def prepare_params(params, compute_dtype=jnp.bfloat16):
    """Input weights are [in_features, out_features] (transposed vs. PyTorch).
    Each fc3 head is padded to round_up(n_out, 128) columns BEFORE fusion so
    the s/t boundary falls exactly on a 128-lane tile edge."""
    w1, b1, w2, b2, w3s, b3s, w3t, b3t = params
    n_in, n_hid = w1.shape
    n_out = w3s.shape[1]

    n_in_p = _round_up(n_in, LANE)
    n_hid_p = _round_up(n_hid, LANE)
    n_out_p = _round_up(n_out, LANE)

    w3 = jnp.concatenate([_pad2d(w3s, n_hid, n_out_p),
                          _pad2d(w3t, n_hid, n_out_p)], axis=1)
    b3 = jnp.concatenate([_pad2d(b3s, 1, n_out_p),
                          _pad2d(b3t, 1, n_out_p)], axis=1)

    padded = (
        _pad2d(w1, n_in_p, n_hid_p).astype(compute_dtype),
        _pad2d(b1, 1, n_hid_p).astype(jnp.float32),
        _pad2d(w2, n_hid_p, n_hid_p).astype(compute_dtype),
        _pad2d(b2, 1, n_hid_p).astype(jnp.float32),
        _pad2d(w3, n_hid_p, 2 * n_out_p).astype(compute_dtype),
        _pad2d(b3, 1, 2 * n_out_p).astype(jnp.float32),
    )
    return padded, (n_in, n_hid, n_out)


# ---------------------------------------------------------------------------
# Hardware-aware tiling helpers
# ---------------------------------------------------------------------------
def _tpu_budget():
    """(per-core VMEM bytes, likely-2-TensorCore chip). Conservative fallback
    (64 MiB, 2 cores) is safe on every generation."""
    vmem_cap = 64 * 1024 * 1024
    try:
        info = pltpu.get_tpu_info()
        for attr in ("vmem_capacity_bytes", "vmem_size_bytes", "vmem_bytes"):
            v = getattr(info, attr, None)
            if v:
                vmem_cap = int(v)
                break
    except Exception:
        pass
    two_cores = vmem_cap <= 64 * 1024 * 1024      # v7x-like: 64 MiB/TC, 2 TCs
    return vmem_cap, two_cores


def _choose_tiling(B, two_cores):
    """Pick the batch tile tm and padded batch B_pad: minimize padding, keep
    tiles MXU-friendly (>=128 for real batches, exact 16-multiple for tiny
    ones), cap tm at 256 on 64-MiB/TC parts, and prefer >= 2 grid steps on
    2-TensorCore chips so the 'parallel' batch axis actually shards."""
    cap = 256 if two_cores else 512
    cands = [t for t in (128, 256, 512) if t <= cap]
    tiny = _round_up(max(B, SUBLANE), SUBLANE)
    if tiny < min(cands):
        cands = [tiny] + cands
    best_key, best = None, None
    for tm in cands:
        b_pad = _round_up(max(B, SUBLANE), tm)
        steps = b_pad // tm
        waste = b_pad - B
        need_split = two_cores and _round_up(max(B, SUBLANE), SUBLANE) >= 2 * SUBLANE
        key = (waste, 1 if (need_split and steps < 2) else 0, -tm)
        if best_key is None or key < best_key:
            best_key, best = key, (tm, b_pad)
    return best


# ---------------------------------------------------------------------------
# Forward wrapper
# ---------------------------------------------------------------------------
def mlp_forward(x, padded_params, dims):
    """Whole MLP forward in one Pallas kernel, tiled over the batch axis with
    weights VMEM-resident."""
    # TODO(synk): for hidden sizes where the resident weights no longer fit the
    # per-TC VMEM budget, switch to a hidden-dim grid axis (or
    # pltpu.emit_pipeline over n_hid) with a pl.when-initialized accumulator.
    w1p, b1p, w2p, b2p, w3p, b3p = padded_params
    n_in, n_hid, n_out = dims
    n_in_p, n_hid_p = w1p.shape
    n_out2_p = w3p.shape[1]
    n_out_p = n_out2_p // 2

    vmem_cap, two_cores = _tpu_budget()
    B = x.shape[0]
    tm, B_pad = _choose_tiling(B, two_cores)
    x_p = _pad2d(x, B_pad, n_in_p).astype(w1p.dtype)
    grid = (B_pad // tm,)

    w_item = jnp.dtype(w1p.dtype).itemsize           # 2 for bf16
    x_item = jnp.dtype(x_p.dtype).itemsize

    flops = 2 * B_pad * (n_in_p * n_hid_p + n_hid_p * n_hid_p + n_hid_p * n_out2_p)
    bytes_accessed = (x_p.size * x_item
                      + (w1p.size + w2p.size + w3p.size) * w_item
                      + (b1p.size + b2p.size + b3p.size) * 4
                      + B_pad * n_out2_p * 4)
    cost = pl.CostEstimate(flops=int(flops),
                           transcendentals=int(B_pad * n_out_p),
                           bytes_accessed=int(bytes_accessed))

    def build(single_buffer_weights):
        if single_buffer_weights:
            resident = lambda shape: pl.BlockSpec(
                shape, lambda i: (0, 0), pipeline_mode=pl.Buffered(1))
        else:
            resident = lambda shape: pl.BlockSpec(shape, lambda i: (0, 0))

        # Explicit VMEM budget: weights (x1 if single-buffered, x2 otherwise) +
        # biases + double-buffered x/out tiles + f32 h1/h2 intermediates, with
        # ~1.5x headroom, capped just below physical per-core VMEM.
        wbuf = 1 if single_buffer_weights else 2
        need = (wbuf * (w1p.size + w2p.size + w3p.size) * w_item
                + (b1p.size + b2p.size + b3p.size) * 4
                + 2 * tm * n_in_p * x_item
                + 2 * tm * n_out2_p * 4
                + 2 * tm * n_hid_p * 4)
        vmem_limit = int(min(max(int(need * 1.5) + (4 << 20), 16 << 20),
                             vmem_cap - (2 << 20)))

        return pl.pallas_call(
            functools.partial(mlp_kernel, n_out_p=n_out_p),
            out_shape=jax.ShapeDtypeStruct((B_pad, n_out2_p), jnp.float32),
            grid=grid,
            in_specs=[
                pl.BlockSpec((tm, n_in_p), lambda i: (i, 0)),            # x tile
                resident((n_in_p, n_hid_p)), resident((1, n_hid_p)),     # fc1
                resident((n_hid_p, n_hid_p)), resident((1, n_hid_p)),    # fc2
                resident((n_hid_p, n_out2_p)), resident((1, n_out2_p)),  # fused fc3
            ],
            out_specs=pl.BlockSpec((tm, n_out2_p), lambda i: (i, 0)),    # lane-dense slab
            compiler_params=pltpu.CompilerParams(
                dimension_semantics=("parallel",),    # shard batch over 2 TCs (v7x)
                vmem_limit_bytes=vmem_limit),
            cost_estimate=cost,
        )

    args = (x_p, w1p, b1p, w2p, b2p, w3p, b3p)
    try:
        out = build(single_buffer_weights=True)(*args)
    except Exception:
        # Fallback if this jax build rejects pipeline_mode=pl.Buffered(1).
        out = build(single_buffer_weights=False)(*args)

    s = out[:B, :n_out]                  # tanh already applied in-kernel
    t = out[:B, n_out_p:n_out_p + n_out]
    return s, t


# ---------------------------------------------------------------------------
# Init + references
# ---------------------------------------------------------------------------
def init_linear(key, fan_in, fan_out):
    """PyTorch-style init U(-1/sqrt(fan_in), 1/sqrt(fan_in)).
    Weight returned as [fan_in, fan_out] (transposed for x @ W)."""
    kw, kb = jax.random.split(key)
    bound = 1.0 / jnp.sqrt(jnp.float32(fan_in))
    w = jax.random.uniform(kw, (fan_in, fan_out), jnp.float32, -bound, bound)
    b = jax.random.uniform(kb, (1, fan_out), jnp.float32, -bound, bound)
    return w, b


def mlp_reference(x, params, matmul_dtype=jnp.float32):
    w1, b1, w2, b2, w3s, b3s, w3t, b3t = params
    dot = lambda a, w: jnp.dot(a.astype(matmul_dtype), w.astype(matmul_dtype),
                               preferred_element_type=jnp.float32)
    h = jnp.maximum(dot(x, w1) + b1, 0.0)
    h = jnp.maximum(dot(h, w2) + b2, 0.0)
    return jnp.tanh(dot(h, w3s) + b3s), dot(h, w3t) + b3t


if __name__ == "__main__":
    n_input, n_output, n_hidden = 8, 4, 32
    batch = 8

    key = jax.random.PRNGKey(0)
    k_x, k1, k2, k3, k4 = jax.random.split(key, 5)

    x = jax.random.normal(k_x, (batch, n_input), jnp.float32)
    w1, b1 = init_linear(k1, n_input, n_hidden)
    w2, b2 = init_linear(k2, n_hidden, n_hidden)
    w3s, b3s = init_linear(k3, n_hidden, n_output)
    w3t, b3t = init_linear(k4, n_hidden, n_output)
    params = (w1, b1, w2, b2, w3s, b3s, w3t, b3t)

    padded_params, dims = prepare_params(params)   # fuse + pad + bf16-cast once
    s, t = mlp_forward(x, padded_params, dims)
    jax.block_until_ready((s, t))

    # Tight check vs. a reference using the same bf16-operand / f32-accumulate
    # math as the kernel.
    s_bf, t_bf = mlp_reference(x, params, matmul_dtype=jnp.bfloat16)
    assert jnp.allclose(s, s_bf, atol=2e-3, rtol=2e-3), "s mismatch (bf16 ref)"
    assert jnp.allclose(t, t_bf, atol=2e-3, rtol=2e-3), "t mismatch (bf16 ref)"

    # Loose sanity check vs. the exact f32 module semantics (bf16 operands add
    # ~1e-2-level error at these fan-ins).
    s_f32, t_f32 = mlp_reference(x, params, matmul_dtype=jnp.float32)
    assert jnp.allclose(s, s_f32, atol=1.5e-1, rtol=1e-1), "s mismatch (f32 ref)"
    assert jnp.allclose(t, t_f32, atol=1.5e-1, rtol=1e-1), "t mismatch (f32 ref)"

    print("KERNEL_OK")
</pallas_src>

<mosaic_0001>
module attributes {stable_mosaic.version = 11 : i64} {
  func.func @mlp_kernel(%arg0: i32, %arg1: memref<16x128xbf16, #tpu.memory_space<vmem>>, %arg2: memref<128x128xbf16, #tpu.memory_space<vmem>>, %arg3: memref<1x128xf32, #tpu.memory_space<vmem>>, %arg4: memref<128x128xbf16, #tpu.memory_space<vmem>>, %arg5: memref<1x128xf32, #tpu.memory_space<vmem>>, %arg6: memref<128x256xbf16, #tpu.memory_space<vmem>>, %arg7: memref<1x256xf32, #tpu.memory_space<vmem>>, %arg8: memref<16x256xf32, #tpu.memory_space<vmem>>) attributes {dimension_semantics = [#tpu.dimension_semantics<parallel>], iteration_bounds = array<i64: 1>, scalar_prefetch = 0 : i64, scratch_operands = 0 : i64, tpu.core_type = #tpu.core_type<tc>, window_params = [{transform_indices = @transform_0, window_bounds = array<i64: 16, 128>}, {pipeline_mode = #tpu.pipeline_mode<synchronous>, transform_indices = @transform_1, window_bounds = array<i64: 128, 128>}, {pipeline_mode = #tpu.pipeline_mode<synchronous>, transform_indices = @transform_2, window_bounds = array<i64: 1, 128>}, {pipeline_mode = #tpu.pipeline_mode<synchronous>, transform_indices = @transform_3, window_bounds = array<i64: 128, 128>}, {pipeline_mode = #tpu.pipeline_mode<synchronous>, transform_indices = @transform_4, window_bounds = array<i64: 1, 128>}, {pipeline_mode = #tpu.pipeline_mode<synchronous>, transform_indices = @transform_5, window_bounds = array<i64: 128, 256>}, {pipeline_mode = #tpu.pipeline_mode<synchronous>, transform_indices = @transform_6, window_bounds = array<i64: 1, 256>}, {transform_indices = @transform_7, window_bounds = array<i64: 16, 256>}]} {
    %c0 = arith.constant 0 : index
    %c0_0 = arith.constant 0 : index
    %0 = vector.load %arg1[%c0, %c0_0] : memref<16x128xbf16, #tpu.memory_space<vmem>>, vector<16x128xbf16>
    %c0_1 = arith.constant 0 : index
    %c0_2 = arith.constant 0 : index
    %1 = vector.load %arg2[%c0_1, %c0_2] : memref<128x128xbf16, #tpu.memory_space<vmem>>, vector<128x128xbf16>
    %cst = arith.constant dense<0.000000e+00> : vector<16x128xf32>
    %2 = tpu.matmul %0, %1, %cst {dimension_numbers = #tpu.dot_dimension_numbers<[1], [0], [0], [1], [0, 0, 1, 1], [], []>} : vector<16x128xbf16>, vector<128x128xbf16>, vector<16x128xf32> -> vector<16x128xf32>
    %c0_3 = arith.constant 0 : index
    %c0_4 = arith.constant 0 : index
    %3 = vector.load %arg3[%c0_3, %c0_4] : memref<1x128xf32, #tpu.memory_space<vmem>>, vector<1x128xf32>
    %4 = vector.broadcast %3 : vector<1x128xf32> to vector<16x128xf32>
    %5 = arith.addf %2, %4 : vector<16x128xf32>
    %cst_5 = arith.constant 0.000000e+00 : f32
    %6 = vector.broadcast %cst_5 : f32 to vector<16x128xf32>
    %7 = arith.maximumf %5, %6 : vector<16x128xf32>
    %8 = arith.truncf %7 : vector<16x128xf32> to vector<16x128xbf16>
    %c0_6 = arith.constant 0 : index
    %c0_7 = arith.constant 0 : index
    %9 = vector.load %arg4[%c0_6, %c0_7] : memref<128x128xbf16, #tpu.memory_space<vmem>>, vector<128x128xbf16>
    %cst_8 = arith.constant dense<0.000000e+00> : vector<16x128xf32>
    %10 = tpu.matmul %8, %9, %cst_8 {dimension_numbers = #tpu.dot_dimension_numbers<[1], [0], [0], [1], [0, 0, 1, 1], [], []>} : vector<16x128xbf16>, vector<128x128xbf16>, vector<16x128xf32> -> vector<16x128xf32>
    %c0_9 = arith.constant 0 : index
    %c0_10 = arith.constant 0 : index
    %11 = vector.load %arg5[%c0_9, %c0_10] : memref<1x128xf32, #tpu.memory_space<vmem>>, vector<1x128xf32>
    %12 = vector.broadcast %11 : vector<1x128xf32> to vector<16x128xf32>
    %13 = arith.addf %10, %12 : vector<16x128xf32>
    %cst_11 = arith.constant 0.000000e+00 : f32
    %14 = vector.broadcast %cst_11 : f32 to vector<16x128xf32>
    %15 = arith.maximumf %13, %14 : vector<16x128xf32>
    %16 = arith.truncf %15 : vector<16x128xf32> to vector<16x128xbf16>
    %c0_12 = arith.constant 0 : index
    %c0_13 = arith.constant 0 : index
    %17 = vector.load %arg6[%c0_12, %c0_13] : memref<128x256xbf16, #tpu.memory_space<vmem>>, vector<128x256xbf16>
    %cst_14 = arith.constant dense<0.000000e+00> : vector<16x256xf32>
    %18 = tpu.matmul %16, %17, %cst_14 {dimension_numbers = #tpu.dot_dimension_numbers<[1], [0], [0], [1], [0, 0, 1, 1], [], []>} : vector<16x128xbf16>, vector<128x256xbf16>, vector<16x256xf32> -> vector<16x256xf32>
    %c0_15 = arith.constant 0 : index
    %c0_16 = arith.constant 0 : index
    %19 = vector.load %arg7[%c0_15, %c0_16] : memref<1x256xf32, #tpu.memory_space<vmem>>, vector<1x256xf32>
    %20 = vector.broadcast %19 : vector<1x256xf32> to vector<16x256xf32>
    %21 = arith.addf %18, %20 : vector<16x256xf32>
    %22 = vector.extract_strided_slice %21 {offsets = [0, 0], sizes = [16, 128], strides = [1, 1]} : vector<16x256xf32> to vector<16x128xf32>
    %23 = math.tanh %22 : vector<16x128xf32>
    %c0_17 = arith.constant 0 : index
    %c0_18 = arith.constant 0 : index
    %24 = vector.load %arg8[%c0_17, %c0_18] : memref<16x256xf32, #tpu.memory_space<vmem>>, vector<16x128xf32>
    tpu.vector_store %arg8[%c0_17, %c0_18], %23 {strides = array<i32>} : memref<16x256xf32, #tpu.memory_space<vmem>>, vector<16x128xf32>,
    %25 = vector.extract_strided_slice %21 {offsets = [0, 128], sizes = [16, 128], strides = [1, 1]} : vector<16x256xf32> to vector<16x128xf32>
    %c0_19 = arith.constant 0 : index
    %c128 = arith.constant 128 : index
    %26 = vector.load %arg8[%c0_19, %c128] : memref<16x256xf32, #tpu.memory_space<vmem>>, vector<16x128xf32>
    tpu.vector_store %arg8[%c0_19, %c128], %25 {strides = array<i32>} : memref<16x256xf32, #tpu.memory_space<vmem>>, vector<16x128xf32>,
    return
  }
  func.func @transform_0(%arg0: i32) -> (i32, i32) {
    %c0_i32 = arith.constant 0 : i32
    %c0_i32_0 = arith.constant 0 : i32
    return %arg0, %c0_i32 : i32, i32
  }
  func.func @transform_1(%arg0: i32) -> (i32, i32) {
    %c0_i32 = arith.constant 0 : i32
    %c0_i32_0 = arith.constant 0 : i32
    %c0_i32_1 = arith.constant 0 : i32
    return %c0_i32, %c0_i32_0 : i32, i32
  }
  func.func @transform_2(%arg0: i32) -> (i32, i32) {
    %c0_i32 = arith.constant 0 : i32
    %c0_i32_0 = arith.constant 0 : i32
    %c0_i32_1 = arith.constant 0 : i32
    return %c0_i32, %c0_i32_0 : i32, i32
  }
  func.func @transform_3(%arg0: i32) -> (i32, i32) {
    %c0_i32 = arith.constant 0 : i32
    %c0_i32_0 = arith.constant 0 : i32
    %c0_i32_1 = arith.constant 0 : i32
    return %c0_i32, %c0_i32_0 : i32, i32
  }
  func.func @transform_4(%arg0: i32) -> (i32, i32) {
    %c0_i32 = arith.constant 0 : i32
    %c0_i32_0 = arith.constant 0 : i32
    %c0_i32_1 = arith.constant 0 : i32
    return %c0_i32, %c0_i32_0 : i32, i32
  }
  func.func @transform_5(%arg0: i32) -> (i32, i32) {
    %c0_i32 = arith.constant 0 : i32
    %c0_i32_0 = arith.constant 0 : i32
    %c0_i32_1 = arith.constant 0 : i32
    return %c0_i32, %c0_i32_0 : i32, i32
  }
  func.func @transform_6(%arg0: i32) -> (i32, i32) {
    %c0_i32 = arith.constant 0 : i32
    %c0_i32_0 = arith.constant 0 : i32
    %c0_i32_1 = arith.constant 0 : i32
    return %c0_i32, %c0_i32_0 : i32, i32
  }
  func.func @transform_7(%arg0: i32) -> (i32, i32) {
    %c0_i32 = arith.constant 0 : i32
    %c0_i32_0 = arith.constant 0 : i32
    return %arg0, %c0_i32 : i32, i32
  }
}

module attributes {stable_mosaic.version = 11 : i64} {
  func.func @mlp_kernel(%arg0: i32, %arg1: memref<16x128xbf16, #tpu.memory_space<vmem>>, %arg2: memref<128x128xbf16, #tpu.memory_space<vmem>>, %arg3: memref<1x128xf32, #tpu.memory_space<vmem>>, %arg4: memref<128x128xbf16, #tpu.memory_space<vmem>>, %arg5: memref<1x128xf32, #tpu.memory_space<vmem>>, %arg6: memref<128x256xbf16, #tpu.memory_space<vmem>>, %arg7: memref<1x256xf32, #tpu.memory_space<vmem>>, %arg8: memref<16x256xf32, #tpu.memory_space<vmem>>) attributes {dimension_semantics = [#tpu.dimension_semantics<parallel>], iteration_bounds = array<i64: 1>, scalar_prefetch = 0 : i64, scratch_operands = 0 : i64, tpu.core_type = #tpu.core_type<tc>, window_params = [{transform_indices = @transform_0, window_bounds = array<i64: 16, 128>}, {pipeline_mode = #tpu.pipeline_mode<synchronous>, transform_indices = @transform_1, window_bounds = array<i64: 128, 128>}, {pipeline_mode = #tpu.pipeline_mode<synchronous>, transform_indices = @transform_2, window_bounds = array<i64: 1, 128>}, {pipeline_mode = #tpu.pipeline_mode<synchronous>, transform_indices = @transform_3, window_bounds = array<i64: 128, 128>}, {pipeline_mode = #tpu.pipeline_mode<synchronous>, transform_indices = @transform_4, window_bounds = array<i64: 1, 128>}, {pipeline_mode = #tpu.pipeline_mode<synchronous>, transform_indices = @transform_5, window_bounds = array<i64: 128, 256>}, {pipeline_mode = #tpu.pipeline_mode<synchronous>, transform_indices = @transform_6, window_bounds = array<i64: 1, 256>}, {transform_indices = @transform_7, window_bounds = array<i64: 16, 256>}]} {
    %c0 = arith.constant 0 : index
    %c0_0 = arith.constant 0 : index
    %0 = vector.load %arg1[%c0, %c0_0] : memref<16x128xbf16, #tpu.memory_space<vmem>>, vector<16x128xbf16>
    %c0_1 = arith.constant 0 : index
    %c0_2 = arith.constant 0 : index
    %1 = vector.load %arg2[%c0_1, %c0_2] : memref<128x128xbf16, #tpu.memory_space<vmem>>, vector<128x128xbf16>
    %cst = arith.constant dense<0.000000e+00> : vector<16x128xf32>
    %2 = tpu.matmul %0, %1, %cst {dimension_numbers = #tpu.dot_dimension_numbers<[1], [0], [0], [1], [0, 0, 1, 1], [], []>} : vector<16x128xbf16>, vector<128x128xbf16>, vector<16x128xf32> -> vector<16x128xf32>
    %c0_3 = arith.constant 0 : index
    %c0_4 = arith.constant 0 : index
    %3 = vector.load %arg3[%c0_3, %c0_4] : memref<1x128xf32, #tpu.memory_space<vmem>>, vector<1x128xf32>
    %4 = vector.broadcast %3 : vector<1x128xf32> to vector<16x128xf32>
    %5 = arith.addf %2, %4 : vector<16x128xf32>
    %cst_5 = arith.constant 0.000000e+00 : f32
    %6 = vector.broadcast %cst_5 : f32 to vector<16x128xf32>
    %7 = arith.maximumf %5, %6 : vector<16x128xf32>
    %8 = arith.truncf %7 : vector<16x128xf32> to vector<16x128xbf16>
    %c0_6 = arith.constant 0 : index
    %c0_7 = arith.constant 0 : index
    %9 = vector.load %arg4[%c0_6, %c0_7] : memref<128x128xbf16, #tpu.memory_space<vmem>>, vector<128x128xbf16>
    %cst_8 = arith.constant dense<0.000000e+00> : vector<16x128xf32>
    %10 = tpu.matmul %8, %9, %cst_8 {dimension_numbers = #tpu.dot_dimension_numbers<[1], [0], [0], [1], [0, 0, 1, 1], [], []>} : vector<16x128xbf16>, vector<128x128xbf16>, vector<16x128xf32> -> vector<16x128xf32>
    %c0_9 = arith.constant 0 : index
    %c0_10 = arith.constant 0 : index
    %11 = vector.load %arg5[%c0_9, %c0_10] : memref<1x128xf32, #tpu.memory_space<vmem>>, vector<1x128xf32>
    %12 = vector.broadcast %11 : vector<1x128xf32> to vector<16x128xf32>
    %13 = arith.addf %10, %12 : vector<16x128xf32>
    %cst_11 = arith.constant 0.000000e+00 : f32
    %14 = vector.broadcast %cst_11 : f32 to vector<16x128xf32>
    %15 = arith.maximumf %13, %14 : vector<16x128xf32>
    %16 = arith.truncf %15 : vector<16x128xf32> to vector<16x128xbf16>
    %c0_12 = arith.constant 0 : index
    %c0_13 = arith.constant 0 : index
    %17 = vector.load %arg6[%c0_12, %c0_13] : memref<128x256xbf16, #tpu.memory_space<vmem>>, vector<128x256xbf16>
    %cst_14 = arith.constant dense<0.000000e+00> : vector<16x256xf32>
    %18 = tpu.matmul %16, %17, %cst_14 {dimension_numbers = #tpu.dot_dimension_numbers<[1], [0], [0], [1], [0, 0, 1, 1], [], []>} : vector<16x128xbf16>, vector<128x256xbf16>, vector<16x256xf32> -> vector<16x256xf32>
    %c0_15 = arith.constant 0 : index
    %c0_16 = arith.constant 0 : index
    %19 = vector.load %arg7[%c0_15, %c0_16] : memref<1x256xf32, #tpu.memory_space<vmem>>, vector<1x256xf32>
    %20 = vector.broadcast %19 : vector<1x256xf32> to vector<16x256xf32>
    %21 = arith.addf %18, %20 : vector<16x256xf32>
    %22 = vector.extract_strided_slice %21 {offsets = [0, 0], sizes = [16, 128], strides = [1, 1]} : vector<16x256xf32> to vector<16x128xf32>
    %23 = math.tanh %22 : vector<16x128xf32>
    %c0_17 = arith.constant 0 : index
    %c0_18 = arith.constant 0 : index
    %24 = vector.load %arg8[%c0_17, %c0_18] : memref<16x256xf32, #tpu.memory_space<vmem>>, vector<16x128xf32>
    tpu.vector_store %arg8[%c0_17, %c0_18], %23 {strides = array<i32>} : memref<16x256xf32, #tpu.memory_space<vmem>>, vector<16x128xf32>,
    %25 = vector.extract_strided_slice %21 {offsets = [0, 128], sizes = [16, 128], strides = [1, 1]} : vector<16x256xf32> to vector<16x128xf32>
    %c0_19 = arith.constant 0 : index
    %c128 = arith.constant 128 : index
    %26 = vector.load %arg8[%c0_19, %c128] : memref<16x256xf32, #tpu.memory_space<vmem>>, vector<16x128xf32>
    tpu.vector_store %arg8[%c0_19, %c128], %25 {strides = array<i32>} : memref<16x256xf32, #tpu.memory_space<vmem>>, vector<16x128xf32>,
    return
  }
  func.func @transform_0(%arg0: i32) -> (i32, i32) {
    %c0_i32 = arith.constant 0 : i32
    %c0_i32_0 = arith.constant 0 : i32
    return %arg0, %c0_i32 : i32, i32
  }
  func.func @transform_1(%arg0: i32) -> (i32, i32) {
    %c0_i32 = arith.constant 0 : i32
    %c0_i32_0 = arith.constant 0 : i32
    %c0_i32_1 = arith.constant 0 : i32
    return %c0_i32, %c0_i32_0 : i32, i32
  }
  func.func @transform_2(%arg0: i32) -> (i32, i32) {
    %c0_i32 = arith.constant 0 : i32
    %c0_i32_0 = arith.constant 0 : i32
    %c0_i32_1 = arith.constant 0 : i32
    return %c0_i32, %c0_i32_0 : i32, i32
  }
  func.func @transform_3(%arg0: i32) -> (i32, i32) {
    %c0_i32 = arith.constant 0 : i32
    %c0_i32_0 = arith.constant 0 : i32
    %c0_i32_1 = arith.constant 0 : i32
    return %c0_i32, %c0_i32_0 : i32, i32
  }
  func.func @transform_4(%arg0: i32) -> (i32, i32) {
    %c0_i32 = arith.constant 0 : i32
    %c0_i32_0 = arith.constant 0 : i32
    %c0_i32_1 = arith.constant 0 : i32
    return %c0_i32, %c0_i32_0 : i32, i32
  }
  func.func @transform_5(%arg0: i32) -> (i32, i32) {
    %c0_i32 = arith.constant 0 : i32
    %c0_i32_0 = arith.constant 0 : i32
    %c0_i32_1 = arith.constant 0 : i32
    return %c0_i32, %c0_i32_0 : i32, i32
  }
  func.func @transform_6(%arg0: i32) -> (i32, i32) {
    %c0_i32 = arith.constant 0 : i32
    %c0_i32_0 = arith.constant 0 : i32
    %c0_i32_1 = arith.constant 0 : i32
    return %c0_i32, %c0_i32_0 : i32, i32
  }
  func.func @transform_7(%arg0: i32) -> (i32, i32) {
    %c0_i32 = arith.constant 0 : i32
    %c0_i32_0 = arith.constant 0 : i32
    return %arg0, %c0_i32 : i32, i32
  }
}

</mosaic_0001>

<llo_original>
// kernel: tpu_custom_call.1
$region0: #{tpu_custom_call.1}
  #allocation0 [shape = 'u32[]', space=smem, size = 0x4, offset = 0x4, fixed_abs, tag = 'smem constant byte address 0x4 - core index']
  #allocation1 [shape = 'u32[144,128]{1,0:T(1,128)}', space=vmem, size = 0x12000, scoped, tag = 'internal scratch']
  %s0 = inlined_call_operand.hbm [shape: bf16[16,128], index: 0, kind: input, shape index: {}]
  %s1 = inlined_call_operand.hbm [shape: bf16[128,128], index: 1, kind: input, shape index: {}]
  %s2 = inlined_call_operand.vmem [shape: f32[1,128], index: 2, kind: input, shape index: {}]
  %s3 = inlined_call_operand.hbm [shape: bf16[128,128], index: 3, kind: input, shape index: {}]
  %s4 = inlined_call_operand.vmem [shape: f32[1,128], index: 4, kind: input, shape index: {}]
  %s5 = inlined_call_operand.hbm [shape: bf16[128,256], index: 5, kind: input, shape index: {}]
  %s6 = inlined_call_operand.vmem [shape: f32[1,256], index: 6, kind: input, shape index: {}]
  %s7 = inlined_call_operand.hbm [shape: f32[16,256], index: 7, kind: output, shape index: {}]
  %s8 = sld [smem:[#allocation0]]
  $region54: #{tpu_custom_call.1} parent=0
    _
  %s10 = ssub.s32 1, %s8
  %s11 = scalar_select 0, %s10, %s8
  $region1: #{tpu_custom_call.1} parent=0
    #allocation2 [shape = 'u8[4096]{0}', space=vmem, size = 0x1000, scoped, tag = 'input window, operand 0, single buffered']
    #allocation3 [shape = 's32[1]{0}', space=sflag, size = 0x4, scoped, tag = 'scoped memory for tpu_custom_call.1']
    #allocation4 [shape = 's32[1]{0}', space=sflag, size = 0x4, scoped, tag = 'scoped memory for tpu_custom_call.1']
    #allocation5 [shape = 'u8[32768]{0}', space=vmem, size = 0x8000, scoped, tag = 'input window, operand 1, single buffered']
    #allocation6 [shape = 's32[1]{0}', space=sflag, size = 0x4, scoped, tag = 'scoped memory for tpu_custom_call.1']
    #allocation7 [shape = 'u8[32768]{0}', space=vmem, size = 0x8000, scoped, tag = 'input window, operand 3, single buffered']
    #allocation8 [shape = 'u8[65536]{0}', space=vmem, size = 0x10000, scoped, tag = 'input window, operand 5, single buffered']
    #allocation9 [shape = 's32[1]{0}', space=sflag, size = 0x4, scoped, tag = 'scoped memory for tpu_custom_call.1']
    #allocation10 [shape = 'u8[16384]{0}', space=vmem, size = 0x4000, scoped, tag = 'output window, operand 0, single buffered']
    %12 = vsyncpa [#allocation3], 0
    %13 = vsyncpa [#allocation6], 0
    %14 = vsyncpa [#allocation9], 0
    %15 = vsyncpa [#allocation4], 0
    // Predicated region
    $region2: #{tpu_custom_call.1} parent=1 // pred_check
      _
    $region3: #{tpu_custom_call.1} parent=1 // pred_check_branch
      %17 = sbr.rel (0) target = $region5
    $region4: #{tpu_custom_call.1} parent=1 // pred_region
      %s19 = ssub.s32 128, 128
      %20 = vsyncadd [#allocation3], %s19
      %s21 = sshll.u32 [#allocation2], 4
      %s22 = int_to_ptr.vmem [resolvable:$true] %s21
      %27 = dma.hbm_to_vmem [thread:$0]  %s0, 128, %s22, [#allocation3], 64, 64, 4
    $region5: #{tpu_custom_call.1} parent=1 // pred_fallthru
      _
    // Predicated region
    $region6: #{tpu_custom_call.1} parent=1 // pred_check
      _
    $region7: #{tpu_custom_call.1} parent=1 // pred_check_branch
      %29 = sbr.rel (0) target = $region9
    $region8: #{tpu_custom_call.1} parent=1 // pred_region
      %s31 = ssub.s32 1024, 1024
      %32 = vsyncadd [#allocation6], %s31
      %s33 = sshll.u32 [#allocation5], 4
      %s34 = int_to_ptr.vmem [resolvable:$true] %s33
      %39 = dma.hbm_to_vmem [thread:$0]  %s1, 1024, %s34, [#allocation6], 64, 64, 4
    $region9: #{tpu_custom_call.1} parent=1 // pred_fallthru
      _
    // Predicated region
    $region10: #{tpu_custom_call.1} parent=1 // pred_check
      _
    $region11: #{tpu_custom_call.1} parent=1 // pred_check_branch
      %41 = sbr.rel (0) target = $region13
    $region12: #{tpu_custom_call.1} parent=1 // pred_region
      _
    $region13: #{tpu_custom_call.1} parent=1 // pred_fallthru
      _
    // Predicated region
    $region14: #{tpu_custom_call.1} parent=1 // pred_check
      _
    $region15: #{tpu_custom_call.1} parent=1 // pred_check_branch
      %43 = sbr.rel (0) target = $region17
    $region16: #{tpu_custom_call.1} parent=1 // pred_region
      %s45 = ssub.s32 1024, 1024
      %46 = vsyncadd [#allocation6], %s45
      %s47 = sshll.u32 [#allocation7], 4
      %s48 = int_to_ptr.vmem [resolvable:$true] %s47
      %53 = dma.hbm_to_vmem [thread:$0]  %s3, 1024, %s48, [#allocation6], 64, 64, 4
    $region17: #{tpu_custom_call.1} parent=1 // pred_fallthru
      _
    // Predicated region
    $region18: #{tpu_custom_call.1} parent=1 // pred_check
      _
    $region19: #{tpu_custom_call.1} parent=1 // pred_check_branch
      %55 = sbr.rel (0) target = $region21
    $region20: #{tpu_custom_call.1} parent=1 // pred_region
      _
    $region21: #{tpu_custom_call.1} parent=1 // pred_fallthru
      _
    // Predicated region
    $region22: #{tpu_custom_call.1} parent=1 // pred_check
      _
    $region23: #{tpu_custom_call.1} parent=1 // pred_check_branch
      %57 = sbr.rel (0) target = $region25
    $region24: #{tpu_custom_call.1} parent=1 // pred_region
      %s59 = ssub.s32 2048, 2048
      %60 = vsyncadd [#allocation9], %s59
      %s61 = sshll.u32 [#allocation8], 4
      %s62 = int_to_ptr.vmem [resolvable:$true] %s61
      %67 = dma.hbm_to_vmem [thread:$0]  %s5, 2048, %s62, [#allocation9], 128, 128, 8
    $region25: #{tpu_custom_call.1} parent=1 // pred_fallthru
      _
    // Predicated region
    $region26: #{tpu_custom_call.1} parent=1 // pred_check
      _
    $region27: #{tpu_custom_call.1} parent=1 // pred_check_branch
      %69 = sbr.rel (0) target = $region29
    $region28: #{tpu_custom_call.1} parent=1 // pred_region
      _
    $region29: #{tpu_custom_call.1} parent=1 // pred_fallthru
      _
    // Predicated region
    $region30: #{tpu_custom_call.1} parent=1 // pred_check
      _
    $region31: #{tpu_custom_call.1} parent=1 // pred_check_branch
      %71 = sbr.rel (0) target = $region33
    $region32: #{tpu_custom_call.1} parent=1 // pred_region
      %72 = dma.done [#allocation3], 128
    $region33: #{tpu_custom_call.1} parent=1 // pred_fallthru
      _
    // Predicated region
    $region34: #{tpu_custom_call.1} parent=1 // pred_check
      _
    $region35: #{tpu_custom_call.1} parent=1 // pred_check_branch
      %74 = sbr.rel (0) target = $region37
    $region36: #{tpu_custom_call.1} parent=1 // pred_region
      %75 = dma.done [#allocation6], 1024
    $region37: #{tpu_custom_call.1} parent=1 // pred_fallthru
      _
    // Predicated region
    $region38: #{tpu_custom_call.1} parent=1 // pred_check
      _
    $region39: #{tpu_custom_call.1} parent=1 // pred_check_branch
      %77 = sbr.rel (0) target = $region41
    $region40: #{tpu_custom_call.1} parent=1 // pred_region
      %78 = dma.done [#allocation6], 1024
    $region41: #{tpu_custom_call.1} parent=1 // pred_fallthru
      _
    // Predicated region
    $region42: #{tpu_custom_call.1} parent=1 // pred_check
      _
    $region43: #{tpu_custom_call.1} parent=1 // pred_check_branch
      %80 = sbr.rel (0) target = $region45
    $region44: #{tpu_custom_call.1} parent=1 // pred_region
      %81 = dma.done [#allocation9], 2048
    $region45: #{tpu_custom_call.1} parent=1 // pred_fallthru
      _
    %v83 = vld [vmem:[#allocation2] sm:$0xf]
    %v84 = vld [vmem:[#allocation2 + $0x4] sm:$0xf]
    %v85 = vld [vmem:[#allocation5] sm:$0xf]
    %v86 = vld [vmem:[#allocation5 + $0x4] sm:$0xf]
    %v87 = vld [vmem:[#allocation5 + $0x8] sm:$0xf]
    %v88 = vld [vmem:[#allocation5 + $0xc] sm:$0xf]
    %v89 = vld [vmem:[#allocation5 + $0x10] sm:$0xf]
    %v90 = vld [vmem:[#allocation5 + $0x14] sm:$0xf]
    %v91 = vld [vmem:[#allocation5 + $0x18] sm:$0xf]
    %v92 = vld [vmem:[#allocation5 + $0x1c] sm:$0xf]
    %v93 = vld [vmem:[#allocation5 + $0x20] sm:$0xf]
    %v94 = vld [vmem:[#allocation5 + $0x24] sm:$0xf]
    %v95 = vld [vmem:[#allocation5 + $0x28] sm:$0xf]
    %v96 = vld [vmem:[#allocation5 + $0x2c] sm:$0xf]
    %v97 = vld [vmem:[#allocation5 + $0x30] sm:$0xf]
    %v98 = vld [vmem:[#allocation5 + $0x34] sm:$0xf]
    %v99 = vld [vmem:[#allocation5 + $0x38] sm:$0xf]
    %v100 = vld [vmem:[#allocation5 + $0x3c] sm:$0xf]
    %v101 = vld [vmem:[%s2] sm:$0x1]
    %v103 = vlaneseq
    %v104 = vshrl.u32 %v103, 7
    %v105 = vsub.s32 0, %v104
    %v106 = vrot.slane %v101, %v105
    %v110 = vunpack.c.l.b16 %v83
    %v111 = vunpack.c.l.b16 %v84
    %v112 = vpack.c.b16 %v111, %v110
    %v130 = vunpack.c.l.b16 %v85
    %v131 = vunpack.c.l.b16 %v86
    %v132 = vunpack.c.l.b16 %v87
    %v133 = vunpack.c.l.b16 %v88
    %v134 = vunpack.c.l.b16 %v89
    %v135 = vunpack.c.l.b16 %v90
    %v136 = vunpack.c.l.b16 %v91
    %v137 = vunpack.c.l.b16 %v92
    %v138 = vunpack.c.l.b16 %v93
    %v139 = vunpack.c.l.b16 %v94
    %v140 = vunpack.c.l.b16 %v95
    %v141 = vunpack.c.l.b16 %v96
    %v142 = vunpack.c.l.b16 %v97
    %v143 = vunpack.c.l.b16 %v98
    %v144 = vunpack.c.l.b16 %v99
    %v145 = vunpack.c.l.b16 %v100
    %v146 = vpack.c.b16 %v131, %v130
    %v147 = vpack.c.b16 %v133, %v132
    %v148 = vpack.c.b16 %v135, %v134
    %v149 = vpack.c.b16 %v137, %v136
    %v150 = vpack.c.b16 %v139, %v138
    %v151 = vpack.c.b16 %v141, %v140
    %v152 = vpack.c.b16 %v143, %v142
    %v153 = vpack.c.b16 %v145, %v144
    %162 = vmatprep.subr.bf16.mxu0 0
    %163 = vmatpush1.bf16.msra.mxu0 %v153
    %164 = vmatprep.subr.bf16.mxu0 0
    %165 = vmatpush1.bf16.msra.mxu0 %v152
    %166 = vmatprep.subr.bf16.mxu0 0
    %167 = vmatpush1.bf16.msra.mxu0 %v151
    %168 = vmatprep.subr.bf16.mxu0 0
    %169 = vmatpush1.bf16.msra.mxu0 %v150
    %170 = vmatprep.subr.bf16.mxu0 0
    %171 = vmatpush1.bf16.msra.mxu0 %v149
    %172 = vmatprep.subr.bf16.mxu0 0
    %173 = vmatpush1.bf16.msra.mxu0 %v148
    %174 = vmatprep.subr.bf16.mxu0 0
    %175 = vmatpush1.bf16.msra.mxu0 %v147
    %176 = vmatprep.subr.bf16.mxu0 0
    %177 = vmatpush1.bf16.msra.mxu0 %v146
    %178 = vmatprep.subr.bf16.mxu0 0
    %179 = vmatpush2.bf16.msra.mxu0 0
    %180 = vmatprep.subr.bf16.mxu0 0
    %181 = vmatpush2.bf16.msra.mxu0 0
    %182 = vmatprep.subr.bf16.mxu0 0
    %183 = vmatpush2.bf16.msra.mxu0 0
    %184 = vmatprep.subr.bf16.mxu0 0
    %185 = vmatpush2.bf16.msra.mxu0 0
    %186 = vmatprep.subr.bf16.mxu0 0
    %187 = vmatpush2.bf16.msra.mxu0 0
    %188 = vmatprep.subr.bf16.mxu0 0
    %189 = vmatpush2.bf16.msra.mxu0 0
    %190 = vmatprep.subr.bf16.mxu0 0
    %191 = vmatpush2.bf16.msra.mxu0 0
    %192 = vmatprep.subr.bf16.mxu0 0
    %193 = vmatpush2.bf16.msra.mxu0 0
    %194 = vmatprep.mubr.bf16.mxu0 0
    %195 = vmatmul.mubr.bf16.gmra.mxu0 %v112
    %v196 = vpop.f32.mrf.mxu0
    %v197 = vadd.f32 %v106, %v196
    %v198 = vpop.f32.mrf.mxu0
    %v199 = vpop.f32.mrf.mxu0
    %v200 = vadd.f32 %v106, %v199
    %v201 = vpop.f32.mrf.mxu0
    %202 = vdwg.mxu0
    %v203 = vmax.f32 %v197, 0.0
    %v204 = vmax.f32 %v200, 0.0
    %v205 = vpack.c.bf16 %v204, %v203
    %v206 = vld [vmem:[#allocation7] sm:$0xf]
    %v207 = vld [vmem:[#allocation7 + $0x4] sm:$0xf]
    %v208 = vld [vmem:[#allocation7 + $0x8] sm:$0xf]
    %v209 = vld [vmem:[#allocation7 + $0xc] sm:$0xf]
    %v210 = vld [vmem:[#allocation7 + $0x10] sm:$0xf]
    %v211 = vld [vmem:[#allocation7 + $0x14] sm:$0xf]
    %v212 = vld [vmem:[#allocation7 + $0x18] sm:$0xf]
    %v213 = vld [vmem:[#allocation7 + $0x1c] sm:$0xf]
    %v214 = vld [vmem:[#allocation7 + $0x20] sm:$0xf]
    %v215 = vld [vmem:[#allocation7 + $0x24] sm:$0xf]
    %v216 = vld [vmem:[#allocation7 + $0x28] sm:$0xf]
    %v217 = vld [vmem:[#allocation7 + $0x2c] sm:$0xf]
    %v218 = vld [vmem:[#allocation7 + $0x30] sm:$0xf]
    %v219 = vld [vmem:[#allocation7 + $0x34] sm:$0xf]
    %v220 = vld [vmem:[#allocation7 + $0x38] sm:$0xf]
    %v221 = vld [vmem:[#allocation7 + $0x3c] sm:$0xf]
    %v222 = vld [vmem:[%s4] sm:$0x1]
    %v224 = vlaneseq
    %v225 = vshrl.u32 %v224, 7
    %v226 = vsub.s32 0, %v225
    %v227 = vrot.slane %v222, %v226
    %v245 = vunpack.c.l.b16 %v206
    %v246 = vunpack.c.l.b16 %v207
    %v247 = vunpack.c.l.b16 %v208
    %v248 = vunpack.c.l.b16 %v209
    %v249 = vunpack.c.l.b16 %v210
    %v250 = vunpack.c.l.b16 %v211
    %v251 = vunpack.c.l.b16 %v212
    %v252 = vunpack.c.l.b16 %v213
    %v253 = vunpack.c.l.b16 %v214
    %v254 = vunpack.c.l.b16 %v215
    %v255 = vunpack.c.l.b16 %v216
    %v256 = vunpack.c.l.b16 %v217
    %v257 = vunpack.c.l.b16 %v218
    %v258 = vunpack.c.l.b16 %v219
    %v259 = vunpack.c.l.b16 %v220
    %v260 = vunpack.c.l.b16 %v221
    %v261 = vpack.c.b16 %v246, %v245
    %v262 = vpack.c.b16 %v248, %v247
    %v263 = vpack.c.b16 %v250, %v249
    %v264 = vpack.c.b16 %v252, %v251
    %v265 = vpack.c.b16 %v254, %v253
    %v266 = vpack.c.b16 %v256, %v255
    %v267 = vpack.c.b16 %v258, %v257
    %v268 = vpack.c.b16 %v260, %v259
    %277 = vmatprep.subr.bf16.mxu0 0
    %278 = vmatpush1.bf16.msra.mxu0 %v268
    %279 = vmatprep.subr.bf16.mxu0 0
    %280 = vmatpush1.bf16.msra.mxu0 %v267
    %281 = vmatprep.subr.bf16.mxu0 0
    %282 = vmatpush1.bf16.msra.mxu0 %v266
    %283 = vmatprep.subr.bf16.mxu0 0
    %284 = vmatpush1.bf16.msra.mxu0 %v265
    %285 = vmatprep.subr.bf16.mxu0 0
    %286 = vmatpush1.bf16.msra.mxu0 %v264
    %287 = vmatprep.subr.bf16.mxu0 0
    %288 = vmatpush1.bf16.msra.mxu0 %v263
    %289 = vmatprep.subr.bf16.mxu0 0
    %290 = vmatpush1.bf16.msra.mxu0 %v262
    %291 = vmatprep.subr.bf16.mxu0 0
    %292 = vmatpush1.bf16.msra.mxu0 %v261
    %293 = vmatprep.subr.bf16.mxu0 0
    %294 = vmatpush2.bf16.msra.mxu0 0
    %295 = vmatprep.subr.bf16.mxu0 0
    %296 = vmatpush2.bf16.msra.mxu0 0
    %297 = vmatprep.subr.bf16.mxu0 0
    %298 = vmatpush2.bf16.msra.mxu0 0
    %299 = vmatprep.subr.bf16.mxu0 0
    %300 = vmatpush2.bf16.msra.mxu0 0
    %301 = vmatprep.subr.bf16.mxu0 0
    %302 = vmatpush2.bf16.msra.mxu0 0
    %303 = vmatprep.subr.bf16.mxu0 0
    %304 = vmatpush2.bf16.msra.mxu0 0
    %305 = vmatprep.subr.bf16.mxu0 0
    %306 = vmatpush2.bf16.msra.mxu0 0
    %307 = vmatprep.subr.bf16.mxu0 0
    %308 = vmatpush2.bf16.msra.mxu0 0
    %309 = vmatprep.mubr.bf16.mxu0 0
    %310 = vmatmul.mubr.bf16.gmra.mxu0 %v205
    %v311 = vpop.f32.mrf.mxu0
    %v312 = vadd.f32 %v227, %v311
    %v313 = vpop.f32.mrf.mxu0
    %v314 = vpop.f32.mrf.mxu0
    %v315 = vadd.f32 %v227, %v314
    %v316 = vpop.f32.mrf.mxu0
    %317 = vdwg.mxu0
    %v318 = vmax.f32 %v312, 0.0
    %v319 = vmax.f32 %v315, 0.0
    %v320 = vpack.c.bf16 %v319, %v318
    %v321 = vld [vmem:[#allocation8] sm:$0xff]
    %v322 = vld [vmem:[#allocation8 + $0x8] sm:$0xff]
    %v323 = vld [vmem:[#allocation8 + $0x10] sm:$0xff]
    %v324 = vld [vmem:[#allocation8 + $0x18] sm:$0xff]
    %v325 = vld [vmem:[#allocation8 + $0x20] sm:$0xff]
    %v326 = vld [vmem:[#allocation8 + $0x28] sm:$0xff]
    %v327 = vld [vmem:[#allocation8 + $0x30] sm:$0xff]
    %v328 = vld [vmem:[#allocation8 + $0x38] sm:$0xff]
    %v329 = vld [vmem:[#allocation8 + $0x40] sm:$0xff]
    %v330 = vld [vmem:[#allocation8 + $0x48] sm:$0xff]
    %v331 = vld [vmem:[#allocation8 + $0x50] sm:$0xff]
    %v332 = vld [vmem:[#allocation8 + $0x58] sm:$0xff]
    %v333 = vld [vmem:[#allocation8 + $0x60] sm:$0xff]
    %v334 = vld [vmem:[#allocation8 + $0x68] sm:$0xff]
    %v335 = vld [vmem:[#allocation8 + $0x70] sm:$0xff]
    %v336 = vld [vmem:[#allocation8 + $0x78] sm:$0xff]
    %v337 = vld [vmem:[%s6] sm:$0x3]
    %v339 = vlaneseq
    %v340 = vshrl.u32 %v339, 7
    %v341 = vsub.s32 0, %v340
    %v342 = vrot.slane %v337, %v341
    %v343 = vlaneseq
    %v344 = vshrl.u32 %v343, 7
    %v345 = vsub.s32 1, %v344
    %v346 = vrot.slane %v337, %v345
    %v365 = vunpack.c.l.b16 %v321
    %v366 = vunpack.c.h.b16 %v321
    %v367 = vunpack.c.l.b16 %v322
    %v368 = vunpack.c.h.b16 %v322
    %v369 = vunpack.c.l.b16 %v323
    %v370 = vunpack.c.h.b16 %v323
    %v371 = vunpack.c.l.b16 %v324
    %v372 = vunpack.c.h.b16 %v324
    %v373 = vunpack.c.l.b16 %v325
    %v374 = vunpack.c.h.b16 %v325
    %v375 = vunpack.c.l.b16 %v326
    %v376 = vunpack.c.h.b16 %v326
    %v377 = vunpack.c.l.b16 %v327
    %v378 = vunpack.c.h.b16 %v327
    %v379 = vunpack.c.l.b16 %v328
    %v380 = vunpack.c.h.b16 %v328
    %v381 = vunpack.c.l.b16 %v329
    %v382 = vunpack.c.h.b16 %v329
    %v383 = vunpack.c.l.b16 %v330
    %v384 = vunpack.c.h.b16 %v330
    %v385 = vunpack.c.l.b16 %v331
    %v386 = vunpack.c.h.b16 %v331
    %v387 = vunpack.c.l.b16 %v332
    %v388 = vunpack.c.h.b16 %v332
    %v389 = vunpack.c.l.b16 %v333
    %v390 = vunpack.c.h.b16 %v333
    %v391 = vunpack.c.l.b16 %v334
    %v392 = vunpack.c.h.b16 %v334
    %v393 = vunpack.c.l.b16 %v335
    %v394 = vunpack.c.h.b16 %v335
    %v395 = vunpack.c.l.b16 %v336
    %v396 = vunpack.c.h.b16 %v336
    %v397 = vpack.c.b16 %v367, %v365
    %v398 = vpack.c.b16 %v368, %v366
    %v399 = vpack.c.b16 %v371, %v369
    %v400 = vpack.c.b16 %v372, %v370
    %v401 = vpack.c.b16 %v375, %v373
    %v402 = vpack.c.b16 %v376, %v374
    %v403 = vpack.c.b16 %v379, %v377
    %v404 = vpack.c.b16 %v380, %v378
    %v405 = vpack.c.b16 %v383, %v381
    %v406 = vpack.c.b16 %v384, %v382
    %v407 = vpack.c.b16 %v387, %v385
    %v408 = vpack.c.b16 %v388, %v386
    %v409 = vpack.c.b16 %v391, %v389
    %v410 = vpack.c.b16 %v392, %v390
    %v411 = vpack.c.b16 %v395, %v393
    %v412 = vpack.c.b16 %v396, %v394
    %429 = vmatprep.subr.bf16.mxu0 %v412
    %430 = vmatpush1.bf16.msra.mxu0 %v411
    %431 = vmatprep.subr.bf16.mxu0 %v410
    %432 = vmatpush1.bf16.msra.mxu0 %v409
    %433 = vmatprep.subr.bf16.mxu0 %v408
    %434 = vmatpush1.bf16.msra.mxu0 %v407
    %435 = vmatprep.subr.bf16.mxu0 %v406
    %436 = vmatpush1.bf16.msra.mxu0 %v405
    %437 = vmatprep.subr.bf16.mxu0 %v404
    %438 = vmatpush1.bf16.msra.mxu0 %v403
    %439 = vmatprep.subr.bf16.mxu0 %v402
    %440 = vmatpush1.bf16.msra.mxu0 %v401
    %441 = vmatprep.subr.bf16.mxu0 %v400
    %442 = vmatpush1.bf16.msra.mxu0 %v399
    %443 = vmatprep.subr.bf16.mxu0 %v398
    %444 = vmatpush1.bf16.msra.mxu0 %v397
    %445 = vmatprep.subr.bf16.mxu0 0
    %446 = vmatpush2.bf16.msra.mxu0 0
    %447 = vmatprep.subr.bf16.mxu0 0
    %448 = vmatpush2.bf16.msra.mxu0 0
    %449 = vmatprep.subr.bf16.mxu0 0
    %450 = vmatpush2.bf16.msra.mxu0 0
    %451 = vmatprep.subr.bf16.mxu0 0
    %452 = vmatpush2.bf16.msra.mxu0 0
    %453 = vmatprep.subr.bf16.mxu0 0
    %454 = vmatpush2.bf16.msra.mxu0 0
    %455 = vmatprep.subr.bf16.mxu0 0
    %456 = vmatpush2.bf16.msra.mxu0 0
    %457 = vmatprep.subr.bf16.mxu0 0
    %458 = vmatpush2.bf16.msra.mxu0 0
    %459 = vmatprep.subr.bf16.mxu0 0
    %460 = vmatpush2.bf16.msra.mxu0 0
    %461 = vmatprep.mubr.bf16.mxu0 0
    %462 = vmatmul.mubr.bf16.gmra.mxu0 %v320
    %v463 = vpop.f32.mrf.mxu0
    %v464 = vadd.f32 %v342, %v463
    %v465 = vpop.f32.mrf.mxu0
    %v466 = vadd.f32 %v346, %v465
    %v467 = vpop.f32.mrf.mxu0
    %v468 = vadd.f32 %v342, %v467
    %v469 = vpop.f32.mrf.mxu0
    %v470 = vadd.f32 %v346, %v469
    %471 = vdwg.mxu0
    %v472 = vtanh.pop %v464
    %v473 = vtanh.pop %v468
    %474 = vst [vmem:[#allocation10] sm:$0xff] %v472
    %475 = vst [vmem:[#allocation10 + $0x10] sm:$0xff] %v473
    %476 = vst [vmem:[#allocation10 + $0x8] sm:$0xff] %v466
    %477 = vst [vmem:[#allocation10 + $0x18] sm:$0xff] %v470
    // Predicated region
    $region46: #{tpu_custom_call.1} parent=1 // pred_check
      _
    $region47: #{tpu_custom_call.1} parent=1 // pred_check_branch
      %479 = sbr.rel (0) target = $region49
    $region48: #{tpu_custom_call.1} parent=1 // pred_region
      %s481 = ssub.s32 512, 512
      %482 = vsyncadd [#allocation4], %s481
      %s483 = sshll.u32 [#allocation10], 4
      %s484 = int_to_ptr.vmem [resolvable:$true] %s483
      %489 = dma.vmem_to_hbm [thread:$0]  %s484, 512, %s7, [#allocation4], 256, 256, 16
    $region49: #{tpu_custom_call.1} parent=1 // pred_fallthru
      _
    // Predicated region
    $region50: #{tpu_custom_call.1} parent=1 // pred_check
      _
    $region51: #{tpu_custom_call.1} parent=1 // pred_check_branch
      %491 = sbr.rel (0) target = $region53
    $region52: #{tpu_custom_call.1} parent=1 // pred_region
      %492 = dma.done [#allocation4], 512
    $region53: #{tpu_custom_call.1} parent=1 // pred_fallthru
      _
    %493 = vsyncpa [#allocation3], 1
    %494 = vsyncpa [#allocation6], 1
    %495 = vsyncpa [#allocation9], 1
    %496 = vsyncpa [#allocation4], 1

// kernel: tpu_custom_call.1
$region0: #{tpu_custom_call.1}
  #allocation0 [shape = 'u32[]', space=smem, size = 0x4, offset = 0x4, fixed_abs, tag = 'smem constant byte address 0x4 - core index']
  #allocation1 [shape = 'u32[144,128]{1,0:T(1,128)}', space=vmem, size = 0x12000, scoped, tag = 'internal scratch']
  %s0 = inlined_call_operand.hbm [shape: bf16[16,128], index: 0, kind: input, shape index: {}]
  %s1 = inlined_call_operand.hbm [shape: bf16[128,128], index: 1, kind: input, shape index: {}]
  %s2 = inlined_call_operand.vmem [shape: f32[1,128], index: 2, kind: input, shape index: {}]
  %s3 = inlined_call_operand.hbm [shape: bf16[128,128], index: 3, kind: input, shape index: {}]
  %s4 = inlined_call_operand.vmem [shape: f32[1,128], index: 4, kind: input, shape index: {}]
  %s5 = inlined_call_operand.hbm [shape: bf16[128,256], index: 5, kind: input, shape index: {}]
  %s6 = inlined_call_operand.vmem [shape: f32[1,256], index: 6, kind: input, shape index: {}]
  %s7 = inlined_call_operand.hbm [shape: f32[16,256], index: 7, kind: output, shape index: {}]
  %s8 = sld [smem:[#allocation0]]
  $region54: #{tpu_custom_call.1} parent=0
    _
  %s10 = ssub.s32 1, %s8
  %s11 = scalar_select 0, %s10, %s8
  $region1: #{tpu_custom_call.1} parent=0
    #allocation2 [shape = 'u8[4096]{0}', space=vmem, size = 0x1000, scoped, tag = 'input window, operand 0, single buffered']
    #allocation3 [shape = 's32[1]{0}', space=sflag, size = 0x4, scoped, tag = 'scoped memory for tpu_custom_call.1']
    #allocation4 [shape = 's32[1]{0}', space=sflag, size = 0x4, scoped, tag = 'scoped memory for tpu_custom_call.1']
    #allocation5 [shape = 'u8[32768]{0}', space=vmem, size = 0x8000, scoped, tag = 'input window, operand 1, single buffered']
    #allocation6 [shape = 's32[1]{0}', space=sflag, size = 0x4, scoped, tag = 'scoped memory for tpu_custom_call.1']
    #allocation7 [shape = 'u8[32768]{0}', space=vmem, size = 0x8000, scoped, tag = 'input window, operand 3, single buffered']
    #allocation8 [shape = 'u8[65536]{0}', space=vmem, size = 0x10000, scoped, tag = 'input window, operand 5, single buffered']
    #allocation9 [shape = 's32[1]{0}', space=sflag, size = 0x4, scoped, tag = 'scoped memory for tpu_custom_call.1']
    #allocation10 [shape = 'u8[16384]{0}', space=vmem, size = 0x4000, scoped, tag = 'output window, operand 0, single buffered']
    %12 = vsyncpa [#allocation3], 0
    %13 = vsyncpa [#allocation6], 0
    %14 = vsyncpa [#allocation9], 0
    %15 = vsyncpa [#allocation4], 0
    // Predicated region
    $region2: #{tpu_custom_call.1} parent=1 // pred_check
      _
    $region3: #{tpu_custom_call.1} parent=1 // pred_check_branch
      %17 = sbr.rel (0) target = $region5
    $region4: #{tpu_custom_call.1} parent=1 // pred_region
      %s19 = ssub.s32 128, 128
      %20 = vsyncadd [#allocation3], %s19
      %s21 = sshll.u32 [#allocation2], 4
      %s22 = int_to_ptr.vmem [resolvable:$true] %s21
      %27 = dma.hbm_to_vmem [thread:$0]  %s0, 128, %s22, [#allocation3], 64, 64, 4
    $region5: #{tpu_custom_call.1} parent=1 // pred_fallthru
      _
    // Predicated region
    $region6: #{tpu_custom_call.1} parent=1 // pred_check
      _
    $region7: #{tpu_custom_call.1} parent=1 // pred_check_branch
      %29 = sbr.rel (0) target = $region9
    $region8: #{tpu_custom_call.1} parent=1 // pred_region
      %s31 = ssub.s32 1024, 1024
      %32 = vsyncadd [#allocation6], %s31
      %s33 = sshll.u32 [#allocation5], 4
      %s34 = int_to_ptr.vmem [resolvable:$true] %s33
      %39 = dma.hbm_to_vmem [thread:$0]  %s1, 1024, %s34, [#allocation6], 64, 64, 4
    $region9: #{tpu_custom_call.1} parent=1 // pred_fallthru
      _
    // Predicated region
    $region10: #{tpu_custom_call.1} parent=1 // pred_check
      _
    $region11: #{tpu_custom_call.1} parent=1 // pred_check_branch
      %41 = sbr.rel (0) target = $region13
    $region12: #{tpu_custom_call.1} parent=1 // pred_region
      _
    $region13: #{tpu_custom_call.1} parent=1 // pred_fallthru
      _
    // Predicated region
    $region14: #{tpu_custom_call.1} parent=1 // pred_check
      _
    $region15: #{tpu_custom_call.1} parent=1 // pred_check_branch
      %43 = sbr.rel (0) target = $region17
    $region16: #{tpu_custom_call.1} parent=1 // pred_region
      %s45 = ssub.s32 1024, 1024
      %46 = vsyncadd [#allocation6], %s45
      %s47 = sshll.u32 [#allocation7], 4
      %s48 = int_to_ptr.vmem [resolvable:$true] %s47
      %53 = dma.hbm_to_vmem [thread:$0]  %s3, 1024, %s48, [#allocation6], 64, 64, 4
    $region17: #{tpu_custom_call.1} parent=1 // pred_fallthru
      _
    // Predicated region
    $region18: #{tpu_custom_call.1} parent=1 // pred_check
      _
    $region19: #{tpu_custom_call.1} parent=1 // pred_check_branch
      %55 = sbr.rel (0) target = $region21
    $region20: #{tpu_custom_call.1} parent=1 // pred_region
      _
    $region21: #{tpu_custom_call.1} parent=1 // pred_fallthru
      _
    // Predicated region
    $region22: #{tpu_custom_call.1} parent=1 // pred_check
      _
    $region23: #{tpu_custom_call.1} parent=1 // pred_check_branch
      %57 = sbr.rel (0) target = $region25
    $region24: #{tpu_custom_call.1} parent=1 // pred_region
      %s59 = ssub.s32 2048, 2048
      %60 = vsyncadd [#allocation9], %s59
      %s61 = sshll.u32 [#allocation8], 4
      %s62 = int_to_ptr.vmem [resolvable:$true] %s61
      %67 = dma.hbm_to_vmem [thread:$0]  %s5, 2048, %s62, [#allocation9], 128, 128, 8
    $region25: #{tpu_custom_call.1} parent=1 // pred_fallthru
      _
    // Predicated region
    $region26: #{tpu_custom_call.1} parent=1 // pred_check
      _
    $region27: #{tpu_custom_call.1} parent=1 // pred_check_branch
      %69 = sbr.rel (0) target = $region29
    $region28: #{tpu_custom_call.1} parent=1 // pred_region
      _
    $region29: #{tpu_custom_call.1} parent=1 // pred_fallthru
      _
    // Predicated region
    $region30: #{tpu_custom_call.1} parent=1 // pred_check
      _
    $region31: #{tpu_custom_call.1} parent=1 // pred_check_branch
      %71 = sbr.rel (0) target = $region33
    $region32: #{tpu_custom_call.1} parent=1 // pred_region
      %72 = dma.done [#allocation3], 128
    $region33: #{tpu_custom_call.1} parent=1 // pred_fallthru
      _
    // Predicated region
    $region34: #{tpu_custom_call.1} parent=1 // pred_check
      _
    $region35: #{tpu_custom_call.1} parent=1 // pred_check_branch
      %74 = sbr.rel (0) target = $region37
    $region36: #{tpu_custom_call.1} parent=1 // pred_region
      %75 = dma.done [#allocation6], 1024
    $region37: #{tpu_custom_call.1} parent=1 // pred_fallthru
      _
    // Predicated region
    $region38: #{tpu_custom_call.1} parent=1 // pred_check
      _
    $region39: #{tpu_custom_call.1} parent=1 // pred_check_branch
      %77 = sbr.rel (0) target = $region41
    $region40: #{tpu_custom_call.1} parent=1 // pred_region
      %78 = dma.done [#allocation6], 1024
    $region41: #{tpu_custom_call.1} parent=1 // pred_fallthru
      _
    // Predicated region
    $region42: #{tpu_custom_call.1} parent=1 // pred_check
      _
    $region43: #{tpu_custom_call.1} parent=1 // pred_check_branch
      %80 = sbr.rel (0) target = $region45
    $region44: #{tpu_custom_call.1} parent=1 // pred_region
      %81 = dma.done [#allocation9], 2048
    $region45: #{tpu_custom_call.1} parent=1 // pred_fallthru
      _
    %v83 = vld [vmem:[#allocation2] sm:$0xf]
    %v84 = vld [vmem:[#allocation2 + $0x4] sm:$0xf]
    %v85 = vld [vmem:[#allocation5] sm:$0xf]
    %v86 = vld [vmem:[#allocation5 + $0x4] sm:$0xf]
    %v87 = vld [vmem:[#allocation5 + $0x8] sm:$0xf]
    %v88 = vld [vmem:[#allocation5 + $0xc] sm:$0xf]
    %v89 = vld [vmem:[#allocation5 + $0x10] sm:$0xf]
    %v90 = vld [vmem:[#allocation5 + $0x14] sm:$0xf]
    %v91 = vld [vmem:[#allocation5 + $0x18] sm:$0xf]
    %v92 = vld [vmem:[#allocation5 + $0x1c] sm:$0xf]
    %v93 = vld [vmem:[#allocation5 + $0x20] sm:$0xf]
    %v94 = vld [vmem:[#allocation5 + $0x24] sm:$0xf]
    %v95 = vld [vmem:[#allocation5 + $0x28] sm:$0xf]
    %v96 = vld [vmem:[#allocation5 + $0x2c] sm:$0xf]
    %v97 = vld [vmem:[#allocation5 + $0x30] sm:$0xf]
    %v98 = vld [vmem:[#allocation5 + $0x34] sm:$0xf]
    %v99 = vld [vmem:[#allocation5 + $0x38] sm:$0xf]
    %v100 = vld [vmem:[#allocation5 + $0x3c] sm:$0xf]
    %v101 = vld [vmem:[%s2] sm:$0x1]
    %v103 = vlaneseq
    %v104 = vshrl.u32 %v103, 7
    %v105 = vsub.s32 0, %v104
    %v106 = vrot.slane %v101, %v105
    %v110 = vunpack.c.l.b16 %v83
    %v111 = vunpack.c.l.b16 %v84
    %v112 = vpack.c.b16 %v111, %v110
    %v130 = vunpack.c.l.b16 %v85
    %v131 = vunpack.c.l.b16 %v86
    %v132 = vunpack.c.l.b16 %v87
    %v133 = vunpack.c.l.b16 %v88
    %v134 = vunpack.c.l.b16 %v89
    %v135 = vunpack.c.l.b16 %v90
    %v136 = vunpack.c.l.b16 %v91
    %v137 = vunpack.c.l.b16 %v92
    %v138 = vunpack.c.l.b16 %v93
    %v139 = vunpack.c.l.b16 %v94
    %v140 = vunpack.c.l.b16 %v95
    %v141 = vunpack.c.l.b16 %v96
    %v142 = vunpack.c.l.b16 %v97
    %v143 = vunpack.c.l.b16 %v98
    %v144 = vunpack.c.l.b16 %v99
    %v145 = vunpack.c.l.b16 %v100
    %v146 = vpack.c.b16 %v131, %v130
    %v147 = vpack.c.b16 %v133, %v132
    %v148 = vpack.c.b16 %v135, %v134
    %v149 = vpack.c.b16 %v137, %v136
    %v150 = vpack.c.b16 %v139, %v138
    %v151 = vpack.c.b16 %v141, %v140
    %v152 = vpack.c.b16 %v143, %v142
    %v153 = vpack.c.b16 %v145, %v144
    %162 = vmatprep.subr.bf16.mxu0 0
    %163 = vmatpush1.bf16.msra.mxu0 %v153
    %164 = vmatprep.subr.bf16.mxu0 0
    %165 = vmatpush1.bf16.msra.mxu0 %v152
    %166 = vmatprep.subr.bf16.mxu0 0
    %167 = vmatpush1.bf16.msra.mxu0 %v151
    %168 = vmatprep.subr.bf16.mxu0 0
    %169 = vmatpush1.bf16.msra.mxu0 %v150
    %170 = vmatprep.subr.bf16.mxu0 0
    %171 = vmatpush1.bf16.msra.mxu0 %v149
    %172 = vmatprep.subr.bf16.mxu0 0
    %173 = vmatpush1.bf16.msra.mxu0 %v148
    %174 = vmatprep.subr.bf16.mxu0 0
    %175 = vmatpush1.bf16.msra.mxu0 %v147
    %176 = vmatprep.subr.bf16.mxu0 0
    %177 = vmatpush1.bf16.msra.mxu0 %v146
    %178 = vmatprep.subr.bf16.mxu0 0
    %179 = vmatpush2.bf16.msra.mxu0 0
    %180 = vmatprep.subr.bf16.mxu0 0
    %181 = vmatpush2.bf16.msra.mxu0 0
    %182 = vmatprep.subr.bf16.mxu0 0
    %183 = vmatpush2.bf16.msra.mxu0 0
    %184 = vmatprep.subr.bf16.mxu0 0
    %185 = vmatpush2.bf16.msra.mxu0 0
    %186 = vmatprep.subr.bf16.mxu0 0
    %187 = vmatpush2.bf16.msra.mxu0 0
    %188 = vmatprep.subr.bf16.mxu0 0
    %189 = vmatpush2.bf16.msra.mxu0 0
    %190 = vmatprep.subr.bf16.mxu0 0
    %191 = vmatpush2.bf16.msra.mxu0 0
    %192 = vmatprep.subr.bf16.mxu0 0
    %193 = vmatpush2.bf16.msra.mxu0 0
    %194 = vmatprep.mubr.bf16.mxu0 0
    %195 = vmatmul.mubr.bf16.gmra.mxu0 %v112
    %v196 = vpop.f32.mrf.mxu0
    %v197 = vadd.f32 %v106, %v196
    %v198 = vpop.f32.mrf.mxu0
    %v199 = vpop.f32.mrf.mxu0
    %v200 = vadd.f32 %v106, %v199
    %v201 = vpop.f32.mrf.mxu0
    %202 = vdwg.mxu0
    %v203 = vmax.f32 %v197, 0.0
    %v204 = vmax.f32 %v200, 0.0
    %v205 = vpack.c.bf16 %v204, %v203
    %v206 = vld [vmem:[#allocation7] sm:$0xf]
    %v207 = vld [vmem:[#allocation7 + $0x4] sm:$0xf]
    %v208 = vld [vmem:[#allocation7 + $0x8] sm:$0xf]
    %v209 = vld [vmem:[#allocation7 + $0xc] sm:$0xf]
    %v210 = vld [vmem:[#allocation7 + $0x10] sm:$0xf]
    %v211 = vld [vmem:[#allocation7 + $0x14] sm:$0xf]
    %v212 = vld [vmem:[#allocation7 + $0x18] sm:$0xf]
    %v213 = vld [vmem:[#allocation7 + $0x1c] sm:$0xf]
    %v214 = vld [vmem:[#allocation7 + $0x20] sm:$0xf]
    %v215 = vld [vmem:[#allocation7 + $0x24] sm:$0xf]
    %v216 = vld [vmem:[#allocation7 + $0x28] sm:$0xf]
    %v217 = vld [vmem:[#allocation7 + $0x2c] sm:$0xf]
    %v218 = vld [vmem:[#allocation7 + $0x30] sm:$0xf]
    %v219 = vld [vmem:[#allocation7 + $0x34] sm:$0xf]
    %v220 = vld [vmem:[#allocation7 + $0x38] sm:$0xf]
    %v221 = vld [vmem:[#allocation7 + $0x3c] sm:$0xf]
    %v222 = vld [vmem:[%s4] sm:$0x1]
    %v224 = vlaneseq
    %v225 = vshrl.u32 %v224, 7
    %v226 = vsub.s32 0, %v225
    %v227 = vrot.slane %v222, %v226
    %v245 = vunpack.c.l.b16 %v206
    %v246 = vunpack.c.l.b16 %v207
    %v247 = vunpack.c.l.b16 %v208
    %v248 = vunpack.c.l.b16 %v209
    %v249 = vunpack.c.l.b16 %v210
    %v250 = vunpack.c.l.b16 %v211
    %v251 = vunpack.c.l.b16 %v212
    %v252 = vunpack.c.l.b16 %v213
    %v253 = vunpack.c.l.b16 %v214
    %v254 = vunpack.c.l.b16 %v215
    %v255 = vunpack.c.l.b16 %v216
    %v256 = vunpack.c.l.b16 %v217
    %v257 = vunpack.c.l.b16 %v218
    %v258 = vunpack.c.l.b16 %v219
    %v259 = vunpack.c.l.b16 %v220
    %v260 = vunpack.c.l.b16 %v221
    %v261 = vpack.c.b16 %v246, %v245
    %v262 = vpack.c.b16 %v248, %v247
    %v263 = vpack.c.b16 %v250, %v249
    %v264 = vpack.c.b16 %v252, %v251
    %v265 = vpack.c.b16 %v254, %v253
    %v266 = vpack.c.b16 %v256, %v255
    %v267 = vpack.c.b16 %v258, %v257
    %v268 = vpack.c.b16 %v260, %v259
    %277 = vmatprep.subr.bf16.mxu0 0
    %278 = vmatpush1.bf16.msra.mxu0 %v268
    %279 = vmatprep.subr.bf16.mxu0 0
    %280 = vmatpush1.bf16.msra.mxu0 %v267
    %281 = vmatprep.subr.bf16.mxu0 0
    %282 = vmatpush1.bf16.msra.mxu0 %v266
    %283 = vmatprep.subr.bf16.mxu0 0
    %284 = vmatpush1.bf16.msra.mxu0 %v265
    %285 = vmatprep.subr.bf16.mxu0 0
    %286 = vmatpush1.bf16.msra.mxu0 %v264
    %287 = vmatprep.subr.bf16.mxu0 0
    %288 = vmatpush1.bf16.msra.mxu0 %v263
    %289 = vmatprep.subr.bf16.mxu0 0
    %290 = vmatpush1.bf16.msra.mxu0 %v262
    %291 = vmatprep.subr.bf16.mxu0 0
    %292 = vmatpush1.bf16.msra.mxu0 %v261
    %293 = vmatprep.subr.bf16.mxu0 0
    %294 = vmatpush2.bf16.msra.mxu0 0
    %295 = vmatprep.subr.bf16.mxu0 0
    %296 = vmatpush2.bf16.msra.mxu0 0
    %297 = vmatprep.subr.bf16.mxu0 0
    %298 = vmatpush2.bf16.msra.mxu0 0
    %299 = vmatprep.subr.bf16.mxu0 0
    %300 = vmatpush2.bf16.msra.mxu0 0
    %301 = vmatprep.subr.bf16.mxu0 0
    %302 = vmatpush2.bf16.msra.mxu0 0
    %303 = vmatprep.subr.bf16.mxu0 0
    %304 = vmatpush2.bf16.msra.mxu0 0
    %305 = vmatprep.subr.bf16.mxu0 0
    %306 = vmatpush2.bf16.msra.mxu0 0
    %307 = vmatprep.subr.bf16.mxu0 0
    %308 = vmatpush2.bf16.msra.mxu0 0
    %309 = vmatprep.mubr.bf16.mxu0 0
    %310 = vmatmul.mubr.bf16.gmra.mxu0 %v205
    %v311 = vpop.f32.mrf.mxu0
    %v312 = vadd.f32 %v227, %v311
    %v313 = vpop.f32.mrf.mxu0
    %v314 = vpop.f32.mrf.mxu0
    %v315 = vadd.f32 %v227, %v314
    %v316 = vpop.f32.mrf.mxu0
    %317 = vdwg.mxu0
    %v318 = vmax.f32 %v312, 0.0
    %v319 = vmax.f32 %v315, 0.0
    %v320 = vpack.c.bf16 %v319, %v318
    %v321 = vld [vmem:[#allocation8] sm:$0xff]
    %v322 = vld [vmem:[#allocation8 + $0x8] sm:$0xff]
    %v323 = vld [vmem:[#allocation8 + $0x10] sm:$0xff]
    %v324 = vld [vmem:[#allocation8 + $0x18] sm:$0xff]
    %v325 = vld [vmem:[#allocation8 + $0x20] sm:$0xff]
    %v326 = vld [vmem:[#allocation8 + $0x28] sm:$0xff]
    %v327 = vld [vmem:[#allocation8 + $0x30] sm:$0xff]
    %v328 = vld [vmem:[#allocation8 + $0x38] sm:$0xff]
    %v329 = vld [vmem:[#allocation8 + $0x40] sm:$0xff]
    %v330 = vld [vmem:[#allocation8 + $0x48] sm:$0xff]
    %v331 = vld [vmem:[#allocation8 + $0x50] sm:$0xff]
    %v332 = vld [vmem:[#allocation8 + $0x58] sm:$0xff]
    %v333 = vld [vmem:[#allocation8 + $0x60] sm:$0xff]
    %v334 = vld [vmem:[#allocation8 + $0x68] sm:$0xff]
    %v335 = vld [vmem:[#allocation8 + $0x70] sm:$0xff]
    %v336 = vld [vmem:[#allocation8 + $0x78] sm:$0xff]
    %v337 = vld [vmem:[%s6] sm:$0x3]
    %v339 = vlaneseq
    %v340 = vshrl.u32 %v339, 7
    %v341 = vsub.s32 0, %v340
    %v342 = vrot.slane %v337, %v341
    %v343 = vlaneseq
    %v344 = vshrl.u32 %v343, 7
    %v345 = vsub.s32 1, %v344
    %v346 = vrot.slane %v337, %v345
    %v365 = vunpack.c.l.b16 %v321
    %v366 = vunpack.c.h.b16 %v321
    %v367 = vunpack.c.l.b16 %v322
    %v368 = vunpack.c.h.b16 %v322
    %v369 = vunpack.c.l.b16 %v323
    %v370 = vunpack.c.h.b16 %v323
    %v371 = vunpack.c.l.b16 %v324
    %v372 = vunpack.c.h.b16 %v324
    %v373 = vunpack.c.l.b16 %v325
    %v374 = vunpack.c.h.b16 %v325
    %v375 = vunpack.c.l.b16 %v326
    %v376 = vunpack.c.h.b16 %v326
    %v377 = vunpack.c.l.b16 %v327
    %v378 = vunpack.c.h.b16 %v327
    %v379 = vunpack.c.l.b16 %v328
    %v380 = vunpack.c.h.b16 %v328
    %v381 = vunpack.c.l.b16 %v329
    %v382 = vunpack.c.h.b16 %v329
    %v383 = vunpack.c.l.b16 %v330
    %v384 = vunpack.c.h.b16 %v330
    %v385 = vunpack.c.l.b16 %v331
    %v386 = vunpack.c.h.b16 %v331
    %v387 = vunpack.c.l.b16 %v332
    %v388 = vunpack.c.h.b16 %v332
    %v389 = vunpack.c.l.b16 %v333
    %v390 = vunpack.c.h.b16 %v333
    %v391 = vunpack.c.l.b16 %v334
    %v392 = vunpack.c.h.b16 %v334
    %v393 = vunpack.c.l.b16 %v335
    %v394 = vunpack.c.h.b16 %v335
    %v395 = vunpack.c.l.b16 %v336
    %v396 = vunpack.c.h.b16 %v336
    %v397 = vpack.c.b16 %v367, %v365
    %v398 = vpack.c.b16 %v368, %v366
    %v399 = vpack.c.b16 %v371, %v369
    %v400 = vpack.c.b16 %v372, %v370
    %v401 = vpack.c.b16 %v375, %v373
    %v402 = vpack.c.b16 %v376, %v374
    %v403 = vpack.c.b16 %v379, %v377
    %v404 = vpack.c.b16 %v380, %v378
    %v405 = vpack.c.b16 %v383, %v381
    %v406 = vpack.c.b16 %v384, %v382
    %v407 = vpack.c.b16 %v387, %v385
    %v408 = vpack.c.b16 %v388, %v386
    %v409 = vpack.c.b16 %v391, %v389
    %v410 = vpack.c.b16 %v392, %v390
    %v411 = vpack.c.b16 %v395, %v393
    %v412 = vpack.c.b16 %v396, %v394
    %429 = vmatprep.subr.bf16.mxu0 %v412
    %430 = vmatpush1.bf16.msra.mxu0 %v411
    %431 = vmatprep.subr.bf16.mxu0 %v410
    %432 = vmatpush1.bf16.msra.mxu0 %v409
    %433 = vmatprep.subr.bf16.mxu0 %v408
    %434 = vmatpush1.bf16.msra.mxu0 %v407
    %435 = vmatprep.subr.bf16.mxu0 %v406
    %436 = vmatpush1.bf16.msra.mxu0 %v405
    %437 = vmatprep.subr.bf16.mxu0 %v404
    %438 = vmatpush1.bf16.msra.mxu0 %v403
    %439 = vmatprep.subr.bf16.mxu0 %v402
    %440 = vmatpush1.bf16.msra.mxu0 %v401
    %441 = vmatprep.subr.bf16.mxu0 %v400
    %442 = vmatpush1.bf16.msra.mxu0 %v399
    %443 = vmatprep.subr.bf16.mxu0 %v398
    %444 = vmatpush1.bf16.msra.mxu0 %v397
    %445 = vmatprep.subr.bf16.mxu0 0
    %446 = vmatpush2.bf16.msra.mxu0 0
    %447 = vmatprep.subr.bf16.mxu0 0
    %448 = vmatpush2.bf16.msra.mxu0 0
    %449 = vmatprep.subr.bf16.mxu0 0
    %450 = vmatpush2.bf16.msra.mxu0 0
    %451 = vmatprep.subr.bf16.mxu0 0
    %452 = vmatpush2.bf16.msra.mxu0 0
    %453 = vmatprep.subr.bf16.mxu0 0
    %454 = vmatpush2.bf16.msra.mxu0 0
    %455 = vmatprep.subr.bf16.mxu0 0
    %456 = vmatpush2.bf16.msra.mxu0 0
    %457 = vmatprep.subr.bf16.mxu0 0
    %458 = vmatpush2.bf16.msra.mxu0 0
    %459 = vmatprep.subr.bf16.mxu0 0
    %460 = vmatpush2.bf16.msra.mxu0 0
    %461 = vmatprep.mubr.bf16.mxu0 0
    %462 = vmatmul.mubr.bf16.gmra.mxu0 %v320
    %v463 = vpop.f32.mrf.mxu0
    %v464 = vadd.f32 %v342, %v463
    %v465 = vpop.f32.mrf.mxu0
    %v466 = vadd.f32 %v346, %v465
    %v467 = vpop.f32.mrf.mxu0
    %v468 = vadd.f32 %v342, %v467
    %v469 = vpop.f32.mrf.mxu0
    %v470 = vadd.f32 %v346, %v469
    %471 = vdwg.mxu0
    %v472 = vtanh.pop %v464
    %v473 = vtanh.pop %v468
    %474 = vst [vmem:[#allocation10] sm:$0xff] %v472
    %475 = vst [vmem:[#allocation10 + $0x10] sm:$0xff] %v473
    %476 = vst [vmem:[#allocation10 + $0x8] sm:$0xff] %v466
    %477 = vst [vmem:[#allocation10 + $0x18] sm:$0xff] %v470
    // Predicated region
    $region46: #{tpu_custom_call.1} parent=1 // pred_check
      _
    $region47: #{tpu_custom_call.1} parent=1 // pred_check_branch
      %479 = sbr.rel (0) target = $region49
    $region48: #{tpu_custom_call.1} parent=1 // pred_region
      %s481 = ssub.s32 512, 512
      %482 = vsyncadd [#allocation4], %s481
      %s483 = sshll.u32 [#allocation10], 4
      %s484 = int_to_ptr.vmem [resolvable:$true] %s483
      %489 = dma.vmem_to_hbm [thread:$0]  %s484, 512, %s7, [#allocation4], 256, 256, 16
    $region49: #{tpu_custom_call.1} parent=1 // pred_fallthru
      _
    // Predicated region
    $region50: #{tpu_custom_call.1} parent=1 // pred_check
      _
    $region51: #{tpu_custom_call.1} parent=1 // pred_check_branch
      %491 = sbr.rel (0) target = $region53
    $region52: #{tpu_custom_call.1} parent=1 // pred_region
      %492 = dma.done [#allocation4], 512
    $region53: #{tpu_custom_call.1} parent=1 // pred_fallthru
      _
    %493 = vsyncpa [#allocation3], 1
    %494 = vsyncpa [#allocation6], 1
    %495 = vsyncpa [#allocation9], 1
    %496 = vsyncpa [#allocation4], 1

</llo_original>
